<compile_context>
chip_gen: v7x
topology: tpu7x:2x2x1
jax: 0.10.0
libtpu: 0.0.40
codegen_flags: <defaults>
</compile_context>

<pallas_src>
import jax
import jax.numpy as jnp
from jax.experimental import pallas as pl
from jax.experimental.pallas import tpu as pltpu


def _select_token_kernel(flag_ref, stacked_hbm, out_hbm, sem):
    # Clamp the modality flag to a valid slab index (0 = text, 1 = image) so a
    # bad input cannot drive an out-of-bounds DMA.
    idx = jnp.clip(flag_ref[0], 0, 1)
    # Single direct HBM -> HBM copy of the selected (token_size, D) slab.
    cp = pltpu.make_async_copy(stacked_hbm.at[idx], out_hbm, sem)
    cp.start()
    cp.wait()


def modality_token_encoder(modality_flag, stacked_tokens):
    """Pallas equivalent of ModalityTokenEncoder.forward.

    modality_flag:  int32 array of shape (1,); 1 -> 'image', 0 -> 'text'.
    stacked_tokens: (2, token_size, projection_dim) float32 parameters,
                    index 0 = text_token, index 1 = image_token.
    Returns the selected token, shape (token_size, projection_dim).
    """
    _, token_size, projection_dim = stacked_tokens.shape

    grid_spec = pltpu.PrefetchScalarGridSpec(
        num_scalar_prefetch=1,
        grid=(1,),
        in_specs=[
            # Raw HBM ref: no auto-pipelined DMA, no VMEM staging buffer.
            pl.BlockSpec(memory_space=pl.ANY),
        ],
        out_specs=pl.BlockSpec(memory_space=pl.ANY),
        scratch_shapes=[pltpu.SemaphoreType.DMA(())],
    )

    return pl.pallas_call(
        _select_token_kernel,
        out_shape=jax.ShapeDtypeStruct(
            (token_size, projection_dim), stacked_tokens.dtype
        ),
        grid_spec=grid_spec,
        compiler_params=pltpu.CompilerParams(
            dimension_semantics=("arbitrary",),
            has_side_effects=True,
        ),
    )(modality_flag, stacked_tokens)


def init_params(key, token_size, projection_dim):
    """Deterministic parameter init mirroring the PyTorch __init__:
       variance ~ U[0,1)*0.5 + 0.1 (used as a std), token ~ Normal(0, std)."""
    k_tv, k_iv, k_tt, k_it = jax.random.split(key, 4)
    text_std = jax.random.uniform(k_tv, ()) * 0.5 + 0.1
    image_std = jax.random.uniform(k_iv, ()) * 0.5 + 0.1
    text_token = jax.random.normal(
        k_tt, (token_size, projection_dim), jnp.float32) * text_std
    image_token = jax.random.normal(
        k_it, (token_size, projection_dim), jnp.float32) * image_std
    return text_token, image_token


if __name__ == "__main__":
    # Shapes consistent with the module defaults: token_size=1,
    # projection_dim=768 (multiple of 128 -> lane-dense layout in HBM).
    token_size = 1
    projection_dim = 768

    key = jax.random.PRNGKey(0)
    text_token, image_token = init_params(key, token_size, projection_dim)

    # Stack once (index 0 = text, 1 = image); the kernel copies only the
    # selected slab with one HBM->HBM DMA.
    stacked_tokens = jnp.stack([text_token, image_token], axis=0)

    flag_image = jnp.array([1], dtype=jnp.int32)  # modality_type == 'image'
    flag_text = jnp.array([0], dtype=jnp.int32)   # modality_type != 'image'

    out_image = modality_token_encoder(flag_image, stacked_tokens)
    out_text = modality_token_encoder(flag_text, stacked_tokens)
    jax.block_until_ready((out_image, out_text))

    # Correctness check against the trivial JAX reference.
    assert out_image.shape == (token_size, projection_dim)
    assert out_text.shape == (token_size, projection_dim)
    assert jnp.allclose(out_image, image_token)
    assert jnp.allclose(out_text, text_token)

    print("KERNEL_OK")
</pallas_src>

<mosaic_0001>
module attributes {stable_mosaic.version = 11 : i64} {
  func.func @_select_token_kernel(%arg0: i32, %arg1: memref<1xi32, #tpu.memory_space<smem>>, %arg2: memref<2x1x768xf32, #tpu.memory_space<any>>, %arg3: memref<1x768xf32, #tpu.memory_space<any>>, %arg4: memref<!tpu.dma_semaphore, #tpu.memory_space<semaphore_mem>>) attributes {dimension_semantics = [#tpu.dimension_semantics<arbitrary>], iteration_bounds = array<i64: 1>, scalar_prefetch = 1 : i64, scratch_operands = 1 : i64, tpu.core_type = #tpu.core_type<tc>, window_params = [{}, {}]} {
    %c0 = arith.constant 0 : index
    %0 = memref.load %arg1[%c0] : memref<1xi32, #tpu.memory_space<smem>>
    %c0_i32 = arith.constant 0 : i32
    %c1_i32 = arith.constant 1 : i32
    %1 = arith.maxsi %c0_i32, %0 : i32
    %2 = arith.minsi %c1_i32, %1 : i32
    %c0_i32_0 = arith.constant 0 : i32
    %c0_i32_1 = arith.constant 0 : i32
    %3 = tpu.memref_slice %arg2[%2, %c0_i32_0, %c0_i32_1] : memref<2x1x768xf32, #tpu.memory_space<any>> -> memref<1x1x768xf32, #tpu.memory_space<any>>
    %4 = tpu.memref_squeeze %3 : memref<1x1x768xf32, #tpu.memory_space<any>> -> memref<1x768xf32, #tpu.memory_space<any>>
    tpu.enqueue_dma source(%4 : memref<1x768xf32, #tpu.memory_space<any>>) target(%arg3 : memref<1x768xf32, #tpu.memory_space<any>>) target_semaphore(%arg4 : memref<!tpu.dma_semaphore, #tpu.memory_space<semaphore_mem>>)
    %c0_i32_2 = arith.constant 0 : i32
    %c0_i32_3 = arith.constant 0 : i32
    %5 = tpu.memref_slice %arg2[%2, %c0_i32_2, %c0_i32_3] : memref<2x1x768xf32, #tpu.memory_space<any>> -> memref<1x1x768xf32, #tpu.memory_space<any>>
    %6 = tpu.memref_squeeze %5 : memref<1x1x768xf32, #tpu.memory_space<any>> -> memref<1x768xf32, #tpu.memory_space<any>>
    tpu.wait_dma2 semaphore(%arg4 : memref<!tpu.dma_semaphore, #tpu.memory_space<semaphore_mem>>) src(%6 : memref<1x768xf32, #tpu.memory_space<any>>) dst(%arg3 : memref<1x768xf32, #tpu.memory_space<any>>)
    return
  }
}

</mosaic_0001>

<llo_original>
// kernel: tpu_custom_call.1
$region0: #{tpu_custom_call.1}
  #allocation0 [shape = 'u32[]', space=smem, size = 0x4, offset = 0x4, fixed_abs, tag = 'smem constant byte address 0x4 - core index']
  #allocation1 [shape = 'u32[144,128]{1,0:T(1,128)}', space=vmem, size = 0x12000, scoped, tag = 'internal scratch']
  #allocation2 [shape = 's32[1]{0}', space=sflag, size = 0x4, scoped, tag = 'scratch operand']
  #allocation3 [shape = 's32[1]{0}', space=sflag, size = 0x4, scoped, tag = 'scoped memory for tpu_custom_call.1']
  #allocation4 [shape = 's32[1]{0:T(128)S(6)}', space=smem, size = 0x200, scoped, tag = 'prefetched SMEM operand 0']
  #allocation5 [shape = 's32[]', space=sflag, size = 0x4, offset = 0, fixed_abs, tag = 'sflag constant byte address 0x0 - dummy sync flag']
  #allocation6 [shape = 'u32[0]{0}', space=smem, size = 0, offset = 0, fixed_abs, tag = 'smem constant byte address 0x0 - null']
  %s0 = inlined_call_operand.<no memory space> [shape: s32[1], index: 0, kind: input, shape index: {}]
  %s1 = inlined_call_operand.hbm [shape: f32[2,1,768], index: 1, kind: input, shape index: {}]
  %s2 = inlined_call_operand.hbm [shape: f32[1,768], index: 2, kind: output, shape index: {}]
  %s3 = sld [smem:[#allocation0]]
  $region2: #{tpu_custom_call.1} parent=0
    _
  %s5 = ssub.s32 1, %s3
  %s6 = scalar_select 0, %s5, %s3
  %7 = sst [smem:[#allocation4]] %s0
  %s8 = sld [smem:[#allocation4]]
  %p9 = scmp.gt.s32.totalorder %s8, 0
  %s10 = scalar_select %p9, %s8, 0
  %p11 = scmp.lt.s32.totalorder %s10, 1
  %s12 = scalar_select %p11, %s10, 1
  %s13 = smul.u32 %s12, 6
  %s14 = smul.addr %s13, 16
  %s15 = scalar_lea.hbm %s1, %s14
  %s17 = sshll.u32 1, 14
  %s18 = sxor.u32 4294967295, %s17
  %s21 = sshll.u32 3, 24
  %s22 = sxor.u32 4294967295, %s21
  %s23 = sand.u32 0, %s22
  %s25 = sor.u32 %s23, 0
  %28 = dma.general %s15, 96, %s2, [#allocation2], [#allocation5], [#allocation6], %s25, 0
  %s29 = smul.u32 1, 6
  %s30 = sshll.u32 %s29, 4
  %31 = dma.done [#allocation2], %s30
  %32 = vsyncmov [#allocation2]
  %s33 = vpop.sfrf %32
  %p34 = scmp.eq.s32.totalorder %s33, 0
  %p35 = pneg %p34
  %37 = shalt.err (%p35)

</llo_original>
